<compile_context>
chip_gen: v5e
topology: v5e:2x2
jax: 0.10.0
libtpu: 0.0.40
codegen_flags: <defaults>
</compile_context>

<pallas_src>
import numpy as np
import jax
import jax.numpy as jnp
from jax.experimental import pallas as pl
from jax.experimental.pallas import tpu as pltpu

LANE = 128  # TPU vreg lane width


def fnn_kernel(x_ref,
               w1_ref, b1_ref, w2_ref, b2_ref, w3_ref, b3_ref,
               w4_ref, b4_ref, w5_ref, b5_ref, w6_ref, b6_ref,
               o_ref):
    """One batch-tile of the 6-layer MLP forward pass (scale pre-folded)."""
    x = x_ref[...]

    def layer(h, w_ref, b_ref):
        z = jnp.dot(h, w_ref[...], preferred_element_type=jnp.float32)
        return z + b_ref[...]                 # bias broadcasts (1, H) -> (TM, H)

    y1 = jnp.tanh(layer(x,  w1_ref, b1_ref))
    y2 = jnp.tanh(layer(y1, w2_ref, b2_ref))
    y3 = jnp.tanh(layer(y2, w3_ref, b3_ref))
    y4 = jnp.tanh(layer(y3, w4_ref, b4_ref))
    y5 = jnp.tanh(layer(y4, w5_ref, b5_ref))
    y  = layer(y5, w6_ref, b6_ref)            # final layer: no tanh
    o_ref[...] = y.astype(o_ref.dtype)


def _num_tensorcores():
    """2 on v7x-class chips (2 TCs/chip), 1 on v5e/v6e (and as a safe default)."""
    try:
        kind = jax.devices()[0].device_kind.lower()
    except Exception:
        return 1
    return 2 if ("v7" in kind or "7x" in kind) else 1


def fnn_forward(x, params, scale_val, *, tile_m=None):
    """params = [(W1,b1), ..., (W6,b6)] with W_l of shape (in, out), b_l of shape (1, out).

    scale_val (== n*a1 in the PyTorch module) is folded into the weights here.
    """
    N, D_in = x.shape
    D_out = params[-1][0].shape[1]
    D_out_pad = max(LANE, pl.cdiv(D_out, LANE) * LANE)   # lane-dense output width

    # Fold the scalar scale into the weights/biases (exact: s*(xW+b) = x(sW)+s*b).
    s = jnp.float32(scale_val)
    folded = [(s * w, s * b) for (w, b) in params]
    # Zero-pad the final layer to a lane-dense output width; extra columns are 0.
    w_last, b_last = folded[-1]
    w_last = jnp.pad(w_last, ((0, 0), (0, D_out_pad - D_out)))
    b_last = jnp.pad(b_last, ((0, 0), (0, D_out_pad - D_out)))
    folded[-1] = (w_last, b_last)

    # Grid choice: one block per TensorCore (v7x gets a 2-way parallel grid),
    # otherwise the whole batch in a single block (no per-step overhead).
    if tile_m is None:
        ncores = _num_tensorcores()
        if ncores > 1 and N % ncores == 0 and (N // ncores) % 8 == 0:
            tile_m = N // ncores
        else:
            tile_m = N
    assert N % tile_m == 0, "batch must be a multiple of tile_m (pad the batch)"

    flat = []
    in_specs = [pl.BlockSpec((tile_m, D_in), lambda i: (i, 0))]   # x: tiled over batch
    for (w, b) in folded:
        flat.append(w)
        in_specs.append(pl.BlockSpec(w.shape, lambda i: (0, 0)))  # full weight resident
        flat.append(b)
        in_specs.append(pl.BlockSpec(b.shape, lambda i: (0, 0)))  # full bias resident

    out_padded = pl.pallas_call(
        fnn_kernel,
        out_shape=jax.ShapeDtypeStruct((N, D_out_pad), x.dtype),
        grid_spec=pltpu.PrefetchScalarGridSpec(
            num_scalar_prefetch=0,
            grid=(N // tile_m,),
            in_specs=in_specs,
            out_specs=pl.BlockSpec((tile_m, D_out_pad), lambda i: (i, 0)),
        ),
        compiler_params=pltpu.CompilerParams(
            dimension_semantics=("parallel",)),
    )(x, *flat)

    return out_padded[:, :D_out]              # slice back to the true output width


def init_params(key, D_in, H, D_out):
    """Deterministic init matching the PyTorch module's normal_ initializers."""
    dims = [(D_in, H), (H, H), (H, H), (H, H), (H, H), (H, D_out)]
    params = []
    for (fan_in, fan_out) in dims:
        key, kw, kb = jax.random.split(key, 3)
        std_w = np.sqrt(2.0 / (fan_in + fan_out))
        w = std_w * jax.random.normal(kw, (fan_in, fan_out), dtype=jnp.float32)
        b = 1.0 * jax.random.normal(kb, (1, fan_out), dtype=jnp.float32)
        params.append((w, b))
    return params


def reference_forward(x, params, scale_val):
    """Pure-JAX reference of the PyTorch forward (scale applied per layer)."""
    h = x
    for li, (w, b) in enumerate(params):
        z = scale_val * (h @ w + b)
        h = jnp.tanh(z) if li < len(params) - 1 else z
    return h


if __name__ == "__main__":
    D_in, H, D_out = 8, 32, 4
    N = 256

    key = jax.random.PRNGKey(0)
    key, kx = jax.random.split(key)
    x = jax.random.normal(kx, (N, D_in), dtype=jnp.float32)

    params = init_params(key, D_in, H, D_out)

    a1 = jnp.float32(0.1)
    n = 1.0 / a1
    scale_val = n * a1                        # == 1.0, kept explicit for fidelity

    out = fnn_forward(x, params, scale_val)
    out = jax.block_until_ready(out)

    ref = reference_forward(x, params, scale_val)
    np.testing.assert_allclose(np.asarray(out), np.asarray(ref), rtol=1e-5, atol=1e-5)

    print("KERNEL_OK")
</pallas_src>

<mosaic_0001>
module attributes {stable_mosaic.version = 11 : i64} {
  func.func @fnn_kernel(%arg0: i32, %arg1: memref<256x8xf32, #tpu.memory_space<vmem>>, %arg2: memref<8x32xf32, #tpu.memory_space<vmem>>, %arg3: memref<1x32xf32, #tpu.memory_space<vmem>>, %arg4: memref<32x32xf32, #tpu.memory_space<vmem>>, %arg5: memref<1x32xf32, #tpu.memory_space<vmem>>, %arg6: memref<32x32xf32, #tpu.memory_space<vmem>>, %arg7: memref<1x32xf32, #tpu.memory_space<vmem>>, %arg8: memref<32x32xf32, #tpu.memory_space<vmem>>, %arg9: memref<1x32xf32, #tpu.memory_space<vmem>>, %arg10: memref<32x32xf32, #tpu.memory_space<vmem>>, %arg11: memref<1x32xf32, #tpu.memory_space<vmem>>, %arg12: memref<32x128xf32, #tpu.memory_space<vmem>>, %arg13: memref<1x128xf32, #tpu.memory_space<vmem>>, %arg14: memref<256x128xf32, #tpu.memory_space<vmem>>) attributes {dimension_semantics = [#tpu.dimension_semantics<parallel>], iteration_bounds = array<i64: 1>, scalar_prefetch = 0 : i64, scratch_operands = 0 : i64, tpu.core_type = #tpu.core_type<tc>, window_params = [{transform_indices = @transform_0, window_bounds = array<i64: 256, 8>}, {pipeline_mode = #tpu.pipeline_mode<synchronous>, transform_indices = @transform_1, window_bounds = array<i64: 8, 32>}, {pipeline_mode = #tpu.pipeline_mode<synchronous>, transform_indices = @transform_2, window_bounds = array<i64: 1, 32>}, {pipeline_mode = #tpu.pipeline_mode<synchronous>, transform_indices = @transform_3, window_bounds = array<i64: 32, 32>}, {pipeline_mode = #tpu.pipeline_mode<synchronous>, transform_indices = @transform_4, window_bounds = array<i64: 1, 32>}, {pipeline_mode = #tpu.pipeline_mode<synchronous>, transform_indices = @transform_5, window_bounds = array<i64: 32, 32>}, {pipeline_mode = #tpu.pipeline_mode<synchronous>, transform_indices = @transform_6, window_bounds = array<i64: 1, 32>}, {pipeline_mode = #tpu.pipeline_mode<synchronous>, transform_indices = @transform_7, window_bounds = array<i64: 32, 32>}, {pipeline_mode = #tpu.pipeline_mode<synchronous>, transform_indices = @transform_8, window_bounds = array<i64: 1, 32>}, {pipeline_mode = #tpu.pipeline_mode<synchronous>, transform_indices = @transform_9, window_bounds = array<i64: 32, 32>}, {pipeline_mode = #tpu.pipeline_mode<synchronous>, transform_indices = @transform_10, window_bounds = array<i64: 1, 32>}, {pipeline_mode = #tpu.pipeline_mode<synchronous>, transform_indices = @transform_11, window_bounds = array<i64: 32, 128>}, {pipeline_mode = #tpu.pipeline_mode<synchronous>, transform_indices = @transform_12, window_bounds = array<i64: 1, 128>}, {transform_indices = @transform_13, window_bounds = array<i64: 256, 128>}]} {
    %c0 = arith.constant 0 : index
    %c0_0 = arith.constant 0 : index
    %0 = vector.load %arg1[%c0, %c0_0] : memref<256x8xf32, #tpu.memory_space<vmem>>, vector<256x8xf32>
    %c0_1 = arith.constant 0 : index
    %c0_2 = arith.constant 0 : index
    %1 = vector.load %arg2[%c0_1, %c0_2] : memref<8x32xf32, #tpu.memory_space<vmem>>, vector<8x32xf32>
    %cst = arith.constant dense<0.000000e+00> : vector<256x32xf32>
    %2 = tpu.matmul %0, %1, %cst {dimension_numbers = #tpu.dot_dimension_numbers<[1], [0], [0], [1], [0, 0, 1, 1], [], []>} : vector<256x8xf32>, vector<8x32xf32>, vector<256x32xf32> -> vector<256x32xf32>
    %c0_3 = arith.constant 0 : index
    %c0_4 = arith.constant 0 : index
    %3 = vector.load %arg3[%c0_3, %c0_4] : memref<1x32xf32, #tpu.memory_space<vmem>>, vector<1x32xf32>
    %4 = vector.broadcast %3 : vector<1x32xf32> to vector<256x32xf32>
    %5 = arith.addf %2, %4 : vector<256x32xf32>
    %6 = math.tanh %5 : vector<256x32xf32>
    %c0_5 = arith.constant 0 : index
    %c0_6 = arith.constant 0 : index
    %7 = vector.load %arg4[%c0_5, %c0_6] : memref<32x32xf32, #tpu.memory_space<vmem>>, vector<32x32xf32>
    %cst_7 = arith.constant dense<0.000000e+00> : vector<256x32xf32>
    %8 = tpu.matmul %6, %7, %cst_7 {dimension_numbers = #tpu.dot_dimension_numbers<[1], [0], [0], [1], [0, 0, 1, 1], [], []>} : vector<256x32xf32>, vector<32x32xf32>, vector<256x32xf32> -> vector<256x32xf32>
    %c0_8 = arith.constant 0 : index
    %c0_9 = arith.constant 0 : index
    %9 = vector.load %arg5[%c0_8, %c0_9] : memref<1x32xf32, #tpu.memory_space<vmem>>, vector<1x32xf32>
    %10 = vector.broadcast %9 : vector<1x32xf32> to vector<256x32xf32>
    %11 = arith.addf %8, %10 : vector<256x32xf32>
    %12 = math.tanh %11 : vector<256x32xf32>
    %c0_10 = arith.constant 0 : index
    %c0_11 = arith.constant 0 : index
    %13 = vector.load %arg6[%c0_10, %c0_11] : memref<32x32xf32, #tpu.memory_space<vmem>>, vector<32x32xf32>
    %cst_12 = arith.constant dense<0.000000e+00> : vector<256x32xf32>
    %14 = tpu.matmul %12, %13, %cst_12 {dimension_numbers = #tpu.dot_dimension_numbers<[1], [0], [0], [1], [0, 0, 1, 1], [], []>} : vector<256x32xf32>, vector<32x32xf32>, vector<256x32xf32> -> vector<256x32xf32>
    %c0_13 = arith.constant 0 : index
    %c0_14 = arith.constant 0 : index
    %15 = vector.load %arg7[%c0_13, %c0_14] : memref<1x32xf32, #tpu.memory_space<vmem>>, vector<1x32xf32>
    %16 = vector.broadcast %15 : vector<1x32xf32> to vector<256x32xf32>
    %17 = arith.addf %14, %16 : vector<256x32xf32>
    %18 = math.tanh %17 : vector<256x32xf32>
    %c0_15 = arith.constant 0 : index
    %c0_16 = arith.constant 0 : index
    %19 = vector.load %arg8[%c0_15, %c0_16] : memref<32x32xf32, #tpu.memory_space<vmem>>, vector<32x32xf32>
    %cst_17 = arith.constant dense<0.000000e+00> : vector<256x32xf32>
    %20 = tpu.matmul %18, %19, %cst_17 {dimension_numbers = #tpu.dot_dimension_numbers<[1], [0], [0], [1], [0, 0, 1, 1], [], []>} : vector<256x32xf32>, vector<32x32xf32>, vector<256x32xf32> -> vector<256x32xf32>
    %c0_18 = arith.constant 0 : index
    %c0_19 = arith.constant 0 : index
    %21 = vector.load %arg9[%c0_18, %c0_19] : memref<1x32xf32, #tpu.memory_space<vmem>>, vector<1x32xf32>
    %22 = vector.broadcast %21 : vector<1x32xf32> to vector<256x32xf32>
    %23 = arith.addf %20, %22 : vector<256x32xf32>
    %24 = math.tanh %23 : vector<256x32xf32>
    %c0_20 = arith.constant 0 : index
    %c0_21 = arith.constant 0 : index
    %25 = vector.load %arg10[%c0_20, %c0_21] : memref<32x32xf32, #tpu.memory_space<vmem>>, vector<32x32xf32>
    %cst_22 = arith.constant dense<0.000000e+00> : vector<256x32xf32>
    %26 = tpu.matmul %24, %25, %cst_22 {dimension_numbers = #tpu.dot_dimension_numbers<[1], [0], [0], [1], [0, 0, 1, 1], [], []>} : vector<256x32xf32>, vector<32x32xf32>, vector<256x32xf32> -> vector<256x32xf32>
    %c0_23 = arith.constant 0 : index
    %c0_24 = arith.constant 0 : index
    %27 = vector.load %arg11[%c0_23, %c0_24] : memref<1x32xf32, #tpu.memory_space<vmem>>, vector<1x32xf32>
    %28 = vector.broadcast %27 : vector<1x32xf32> to vector<256x32xf32>
    %29 = arith.addf %26, %28 : vector<256x32xf32>
    %30 = math.tanh %29 : vector<256x32xf32>
    %c0_25 = arith.constant 0 : index
    %c0_26 = arith.constant 0 : index
    %31 = vector.load %arg12[%c0_25, %c0_26] : memref<32x128xf32, #tpu.memory_space<vmem>>, vector<32x128xf32>
    %cst_27 = arith.constant dense<0.000000e+00> : vector<256x128xf32>
    %32 = tpu.matmul %30, %31, %cst_27 {dimension_numbers = #tpu.dot_dimension_numbers<[1], [0], [0], [1], [0, 0, 1, 1], [], []>} : vector<256x32xf32>, vector<32x128xf32>, vector<256x128xf32> -> vector<256x128xf32>
    %c0_28 = arith.constant 0 : index
    %c0_29 = arith.constant 0 : index
    %33 = vector.load %arg13[%c0_28, %c0_29] : memref<1x128xf32, #tpu.memory_space<vmem>>, vector<1x128xf32>
    %34 = vector.broadcast %33 : vector<1x128xf32> to vector<256x128xf32>
    %35 = arith.addf %32, %34 : vector<256x128xf32>
    %c0_30 = arith.constant 0 : index
    %c0_31 = arith.constant 0 : index
    %36 = vector.load %arg14[%c0_30, %c0_31] : memref<256x128xf32, #tpu.memory_space<vmem>>, vector<256x128xf32>
    tpu.vector_store %arg14[%c0_30, %c0_31], %35 {strides = array<i32>} : memref<256x128xf32, #tpu.memory_space<vmem>>, vector<256x128xf32>,
    return
  }
  func.func @transform_0(%arg0: i32) -> (i32, i32) {
    %c0_i32 = arith.constant 0 : i32
    %c0_i32_0 = arith.constant 0 : i32
    return %arg0, %c0_i32 : i32, i32
  }
  func.func @transform_1(%arg0: i32) -> (i32, i32) {
    %c0_i32 = arith.constant 0 : i32
    %c0_i32_0 = arith.constant 0 : i32
    %c0_i32_1 = arith.constant 0 : i32
    return %c0_i32, %c0_i32_0 : i32, i32
  }
  func.func @transform_2(%arg0: i32) -> (i32, i32) {
    %c0_i32 = arith.constant 0 : i32
    %c0_i32_0 = arith.constant 0 : i32
    %c0_i32_1 = arith.constant 0 : i32
    return %c0_i32, %c0_i32_0 : i32, i32
  }
  func.func @transform_3(%arg0: i32) -> (i32, i32) {
    %c0_i32 = arith.constant 0 : i32
    %c0_i32_0 = arith.constant 0 : i32
    %c0_i32_1 = arith.constant 0 : i32
    return %c0_i32, %c0_i32_0 : i32, i32
  }
  func.func @transform_4(%arg0: i32) -> (i32, i32) {
    %c0_i32 = arith.constant 0 : i32
    %c0_i32_0 = arith.constant 0 : i32
    %c0_i32_1 = arith.constant 0 : i32
    return %c0_i32, %c0_i32_0 : i32, i32
  }
  func.func @transform_5(%arg0: i32) -> (i32, i32) {
    %c0_i32 = arith.constant 0 : i32
    %c0_i32_0 = arith.constant 0 : i32
    %c0_i32_1 = arith.constant 0 : i32
    return %c0_i32, %c0_i32_0 : i32, i32
  }
  func.func @transform_6(%arg0: i32) -> (i32, i32) {
    %c0_i32 = arith.constant 0 : i32
    %c0_i32_0 = arith.constant 0 : i32
    %c0_i32_1 = arith.constant 0 : i32
    return %c0_i32, %c0_i32_0 : i32, i32
  }
  func.func @transform_7(%arg0: i32) -> (i32, i32) {
    %c0_i32 = arith.constant 0 : i32
    %c0_i32_0 = arith.constant 0 : i32
    %c0_i32_1 = arith.constant 0 : i32
    return %c0_i32, %c0_i32_0 : i32, i32
  }
  func.func @transform_8(%arg0: i32) -> (i32, i32) {
    %c0_i32 = arith.constant 0 : i32
    %c0_i32_0 = arith.constant 0 : i32
    %c0_i32_1 = arith.constant 0 : i32
    return %c0_i32, %c0_i32_0 : i32, i32
  }
  func.func @transform_9(%arg0: i32) -> (i32, i32) {
    %c0_i32 = arith.constant 0 : i32
    %c0_i32_0 = arith.constant 0 : i32
    %c0_i32_1 = arith.constant 0 : i32
    return %c0_i32, %c0_i32_0 : i32, i32
  }
  func.func @transform_10(%arg0: i32) -> (i32, i32) {
    %c0_i32 = arith.constant 0 : i32
    %c0_i32_0 = arith.constant 0 : i32
    %c0_i32_1 = arith.constant 0 : i32
    return %c0_i32, %c0_i32_0 : i32, i32
  }
  func.func @transform_11(%arg0: i32) -> (i32, i32) {
    %c0_i32 = arith.constant 0 : i32
    %c0_i32_0 = arith.constant 0 : i32
    %c0_i32_1 = arith.constant 0 : i32
    return %c0_i32, %c0_i32_0 : i32, i32
  }
  func.func @transform_12(%arg0: i32) -> (i32, i32) {
    %c0_i32 = arith.constant 0 : i32
    %c0_i32_0 = arith.constant 0 : i32
    %c0_i32_1 = arith.constant 0 : i32
    return %c0_i32, %c0_i32_0 : i32, i32
  }
  func.func @transform_13(%arg0: i32) -> (i32, i32) {
    %c0_i32 = arith.constant 0 : i32
    %c0_i32_0 = arith.constant 0 : i32
    return %arg0, %c0_i32 : i32, i32
  }
}

</mosaic_0001>

<llo_original>
// kernel: tpu_custom_call.1
$region0: #{tpu_custom_call.1}
  #allocation0 [shape = 'u32[]', space=smem, size = 0x4, offset = 0x4, fixed_abs, tag = 'smem constant byte address 0x4 - core index']
  #allocation1 [shape = 'u32[72,128]{1,0:T(1,128)}', space=vmem, size = 0x9000, scoped, tag = 'internal scratch']
  %s0 = inlined_call_operand.vmem [shape: f32[256,8], index: 0, kind: input, shape index: {}]
  %s1 = inlined_call_operand.vmem [shape: f32[8,32], index: 1, kind: input, shape index: {}]
  %s2 = inlined_call_operand.vmem [shape: f32[1,32], index: 2, kind: input, shape index: {}]
  %s3 = inlined_call_operand.vmem [shape: f32[32,32], index: 3, kind: input, shape index: {}]
  %s4 = inlined_call_operand.vmem [shape: f32[1,32], index: 4, kind: input, shape index: {}]
  %s5 = inlined_call_operand.vmem [shape: f32[32,32], index: 5, kind: input, shape index: {}]
  %s6 = inlined_call_operand.vmem [shape: f32[1,32], index: 6, kind: input, shape index: {}]
  %s7 = inlined_call_operand.vmem [shape: f32[32,32], index: 7, kind: input, shape index: {}]
  %s8 = inlined_call_operand.vmem [shape: f32[1,32], index: 8, kind: input, shape index: {}]
  %s9 = inlined_call_operand.vmem [shape: f32[32,32], index: 9, kind: input, shape index: {}]
  %s10 = inlined_call_operand.vmem [shape: f32[1,32], index: 10, kind: input, shape index: {}]
  %s11 = inlined_call_operand.vmem [shape: f32[32,128], index: 11, kind: input, shape index: {}]
  %s12 = inlined_call_operand.vmem [shape: f32[1,128], index: 12, kind: input, shape index: {}]
  %s13 = inlined_call_operand.hbm [shape: f32[256,128], index: 13, kind: output, shape index: {}]
  %s14 = sld [smem:[#allocation0]]
  $region62: #{tpu_custom_call.1} parent=0
    _
  %s16 = ssub.s32 1, %s14
  %s17 = scalar_select 0, %s16, %s14
  $region1: #{tpu_custom_call.1} parent=0
    #allocation2 [shape = 'u8[131072]{0}', space=vmem, size = 0x20000, scoped, tag = 'output window, operand 0, single buffered']
    #allocation3 [shape = 's32[1]{0}', space=sflag, size = 0x4, scoped, tag = 'scoped memory for tpu_custom_call.1']
    %18 = vsyncpa [#allocation3], 0
    // Predicated region
    $region2: #{tpu_custom_call.1} parent=1 // pred_check
      _
    $region3: #{tpu_custom_call.1} parent=1 // pred_check_branch
      %20 = sbr.rel (0) target = $region5
    $region4: #{tpu_custom_call.1} parent=1 // pred_region
      _
    $region5: #{tpu_custom_call.1} parent=1 // pred_fallthru
      _
    // Predicated region
    $region6: #{tpu_custom_call.1} parent=1 // pred_check
      _
    $region7: #{tpu_custom_call.1} parent=1 // pred_check_branch
      %22 = sbr.rel (0) target = $region9
    $region8: #{tpu_custom_call.1} parent=1 // pred_region
      _
    $region9: #{tpu_custom_call.1} parent=1 // pred_fallthru
      _
    // Predicated region
    $region10: #{tpu_custom_call.1} parent=1 // pred_check
      _
    $region11: #{tpu_custom_call.1} parent=1 // pred_check_branch
      %24 = sbr.rel (0) target = $region13
    $region12: #{tpu_custom_call.1} parent=1 // pred_region
      _
    $region13: #{tpu_custom_call.1} parent=1 // pred_fallthru
      _
    // Predicated region
    $region14: #{tpu_custom_call.1} parent=1 // pred_check
      _
    $region15: #{tpu_custom_call.1} parent=1 // pred_check_branch
      %26 = sbr.rel (0) target = $region17
    $region16: #{tpu_custom_call.1} parent=1 // pred_region
      _
    $region17: #{tpu_custom_call.1} parent=1 // pred_fallthru
      _
    // Predicated region
    $region18: #{tpu_custom_call.1} parent=1 // pred_check
      _
    $region19: #{tpu_custom_call.1} parent=1 // pred_check_branch
      %28 = sbr.rel (0) target = $region21
    $region20: #{tpu_custom_call.1} parent=1 // pred_region
      _
    $region21: #{tpu_custom_call.1} parent=1 // pred_fallthru
      _
    // Predicated region
    $region22: #{tpu_custom_call.1} parent=1 // pred_check
      _
    $region23: #{tpu_custom_call.1} parent=1 // pred_check_branch
      %30 = sbr.rel (0) target = $region25
    $region24: #{tpu_custom_call.1} parent=1 // pred_region
      _
    $region25: #{tpu_custom_call.1} parent=1 // pred_fallthru
      _
    // Predicated region
    $region26: #{tpu_custom_call.1} parent=1 // pred_check
      _
    $region27: #{tpu_custom_call.1} parent=1 // pred_check_branch
      %32 = sbr.rel (0) target = $region29
    $region28: #{tpu_custom_call.1} parent=1 // pred_region
      _
    $region29: #{tpu_custom_call.1} parent=1 // pred_fallthru
      _
    // Predicated region
    $region30: #{tpu_custom_call.1} parent=1 // pred_check
      _
    $region31: #{tpu_custom_call.1} parent=1 // pred_check_branch
      %34 = sbr.rel (0) target = $region33
    $region32: #{tpu_custom_call.1} parent=1 // pred_region
      _
    $region33: #{tpu_custom_call.1} parent=1 // pred_fallthru
      _
    // Predicated region
    $region34: #{tpu_custom_call.1} parent=1 // pred_check
      _
    $region35: #{tpu_custom_call.1} parent=1 // pred_check_branch
      %36 = sbr.rel (0) target = $region37
    $region36: #{tpu_custom_call.1} parent=1 // pred_region
      _
    $region37: #{tpu_custom_call.1} parent=1 // pred_fallthru
      _
    // Predicated region
    $region38: #{tpu_custom_call.1} parent=1 // pred_check
      _
    $region39: #{tpu_custom_call.1} parent=1 // pred_check_branch
      %38 = sbr.rel (0) target = $region41
    $region40: #{tpu_custom_call.1} parent=1 // pred_region
      _
    $region41: #{tpu_custom_call.1} parent=1 // pred_fallthru
      _
    // Predicated region
    $region42: #{tpu_custom_call.1} parent=1 // pred_check
      _
    $region43: #{tpu_custom_call.1} parent=1 // pred_check_branch
      %40 = sbr.rel (0) target = $region45
    $region44: #{tpu_custom_call.1} parent=1 // pred_region
      _
    $region45: #{tpu_custom_call.1} parent=1 // pred_fallthru
      _
    // Predicated region
    $region46: #{tpu_custom_call.1} parent=1 // pred_check
      _
    $region47: #{tpu_custom_call.1} parent=1 // pred_check_branch
      %42 = sbr.rel (0) target = $region49
    $region48: #{tpu_custom_call.1} parent=1 // pred_region
      _
    $region49: #{tpu_custom_call.1} parent=1 // pred_fallthru
      _
    // Predicated region
    $region50: #{tpu_custom_call.1} parent=1 // pred_check
      _
    $region51: #{tpu_custom_call.1} parent=1 // pred_check_branch
      %44 = sbr.rel (0) target = $region53
    $region52: #{tpu_custom_call.1} parent=1 // pred_region
      _
    $region53: #{tpu_custom_call.1} parent=1 // pred_fallthru
      _
    %v45 = vld [vmem:[%s0] sm:$0xff]
    %v46 = vld [vmem:[%s0 + $0x8] sm:$0xff]
    %v47 = vld [vmem:[%s0 + $0x10] sm:$0xff]
    %v48 = vld [vmem:[%s0 + $0x18] sm:$0xff]
    %v49 = vld [vmem:[%s0 + $0x20] sm:$0xff]
    %v50 = vld [vmem:[%s0 + $0x28] sm:$0xff]
    %v51 = vld [vmem:[%s0 + $0x30] sm:$0xff]
    %v52 = vld [vmem:[%s0 + $0x38] sm:$0xff]
    %v53 = vld [vmem:[%s0 + $0x40] sm:$0xff]
    %v54 = vld [vmem:[%s0 + $0x48] sm:$0xff]
    %v55 = vld [vmem:[%s0 + $0x50] sm:$0xff]
    %v56 = vld [vmem:[%s0 + $0x58] sm:$0xff]
    %v57 = vld [vmem:[%s0 + $0x60] sm:$0xff]
    %v58 = vld [vmem:[%s0 + $0x68] sm:$0xff]
    %v59 = vld [vmem:[%s0 + $0x70] sm:$0xff]
    %v60 = vld [vmem:[%s0 + $0x78] sm:$0xff]
    %v61 = vld [vmem:[%s0 + $0x80] sm:$0xff]
    %v62 = vld [vmem:[%s0 + $0x88] sm:$0xff]
    %v63 = vld [vmem:[%s0 + $0x90] sm:$0xff]
    %v64 = vld [vmem:[%s0 + $0x98] sm:$0xff]
    %v65 = vld [vmem:[%s0 + $0xa0] sm:$0xff]
    %v66 = vld [vmem:[%s0 + $0xa8] sm:$0xff]
    %v67 = vld [vmem:[%s0 + $0xb0] sm:$0xff]
    %v68 = vld [vmem:[%s0 + $0xb8] sm:$0xff]
    %v69 = vld [vmem:[%s0 + $0xc0] sm:$0xff]
    %v70 = vld [vmem:[%s0 + $0xc8] sm:$0xff]
    %v71 = vld [vmem:[%s0 + $0xd0] sm:$0xff]
    %v72 = vld [vmem:[%s0 + $0xd8] sm:$0xff]
    %v73 = vld [vmem:[%s0 + $0xe0] sm:$0xff]
    %v74 = vld [vmem:[%s0 + $0xe8] sm:$0xff]
    %v75 = vld [vmem:[%s0 + $0xf0] sm:$0xff]
    %v76 = vld [vmem:[%s0 + $0xf8] sm:$0xff]
    %v77 = vld [vmem:[%s1] sm:$0xff]
    %v78 = vld [vmem:[%s2] sm:$0x1]
    %v80 = vperm.slane %v78, 0
    %vm82 = vcmask 64512
    %v84 = vsel %vm82, %v45, 0
    %v87 = vsel %vm82, %v46, 0
    %v90 = vsel %vm82, %v47, 0
    %v93 = vsel %vm82, %v48, 0
    %v96 = vsel %vm82, %v49, 0
    %v99 = vsel %vm82, %v50, 0
    %v102 = vsel %vm82, %v51, 0
    %v105 = vsel %vm82, %v52, 0
    %v108 = vsel %vm82, %v53, 0
    %v111 = vsel %vm82, %v54, 0
    %v114 = vsel %vm82, %v55, 0
    %v117 = vsel %vm82, %v56, 0
    %v120 = vsel %vm82, %v57, 0
    %v123 = vsel %vm82, %v58, 0
    %v126 = vsel %vm82, %v59, 0
    %v129 = vsel %vm82, %v60, 0
    %v132 = vsel %vm82, %v61, 0
    %v135 = vsel %vm82, %v62, 0
    %v138 = vsel %vm82, %v63, 0
    %v141 = vsel %vm82, %v64, 0
    %v144 = vsel %vm82, %v65, 0
    %v147 = vsel %vm82, %v66, 0
    %v150 = vsel %vm82, %v67, 0
    %v153 = vsel %vm82, %v68, 0
    %v156 = vsel %vm82, %v69, 0
    %v159 = vsel %vm82, %v70, 0
    %v162 = vsel %vm82, %v71, 0
    %v165 = vsel %vm82, %v72, 0
    %v168 = vsel %vm82, %v73, 0
    %v171 = vsel %vm82, %v74, 0
    %v174 = vsel %vm82, %v75, 0
    %v177 = vsel %vm82, %v76, 0
    %179 = vmatpush.msra.mxu0 0.0
    %180 = vmatpush.msra.mxu0 0.0
    %181 = vmatpush.msra.mxu0 0.0
    %182 = vmatpush.msra.mxu0 0.0
    %183 = vmatpush.msra.mxu0 0.0
    %184 = vmatpush.msra.mxu0 0.0
    %185 = vmatpush.msra.mxu0 0.0
    %186 = vmatpush.msra.mxu0 0.0
    %187 = vmatpush.msra.mxu0 0.0
    %188 = vmatpush.msra.mxu0 0.0
    %189 = vmatpush.msra.mxu0 0.0
    %190 = vmatpush.msra.mxu0 0.0
    %191 = vmatpush.msra.mxu0 0.0
    %192 = vmatpush.msra.mxu0 0.0
    %193 = vmatpush.msra.mxu0 0.0
    %194 = vmatpush.msra.mxu0 %v77
    %195 = vmatmul.f32.gmra.mxu0 %v84
    %v196 = vpop.f32.mrf.mxu0
    %v197 = vadd.f32 %v80, %v196
    %198 = vmatmul.f32.gmra.mxu0 %v87
    %v199 = vpop.f32.mrf.mxu0
    %v200 = vadd.f32 %v80, %v199
    %201 = vmatmul.f32.gmra.mxu0 %v90
    %v202 = vpop.f32.mrf.mxu0
    %v203 = vadd.f32 %v80, %v202
    %204 = vmatmul.f32.gmra.mxu0 %v93
    %v205 = vpop.f32.mrf.mxu0
    %v206 = vadd.f32 %v80, %v205
    %207 = vmatmul.f32.gmra.mxu0 %v96
    %v208 = vpop.f32.mrf.mxu0
    %v209 = vadd.f32 %v80, %v208
    %210 = vmatmul.f32.gmra.mxu0 %v99
    %v211 = vpop.f32.mrf.mxu0
    %v212 = vadd.f32 %v80, %v211
    %213 = vmatmul.f32.gmra.mxu0 %v102
    %v214 = vpop.f32.mrf.mxu0
    %v215 = vadd.f32 %v80, %v214
    %216 = vmatmul.f32.gmra.mxu0 %v105
    %v217 = vpop.f32.mrf.mxu0
    %v218 = vadd.f32 %v80, %v217
    %219 = vmatmul.f32.gmra.mxu0 %v108
    %v220 = vpop.f32.mrf.mxu0
    %v221 = vadd.f32 %v80, %v220
    %222 = vmatmul.f32.gmra.mxu0 %v111
    %v223 = vpop.f32.mrf.mxu0
    %v224 = vadd.f32 %v80, %v223
    %225 = vmatmul.f32.gmra.mxu0 %v114
    %v226 = vpop.f32.mrf.mxu0
    %v227 = vadd.f32 %v80, %v226
    %228 = vmatmul.f32.gmra.mxu0 %v117
    %v229 = vpop.f32.mrf.mxu0
    %v230 = vadd.f32 %v80, %v229
    %231 = vmatmul.f32.gmra.mxu0 %v120
    %v232 = vpop.f32.mrf.mxu0
    %v233 = vadd.f32 %v80, %v232
    %234 = vmatmul.f32.gmra.mxu0 %v123
    %v235 = vpop.f32.mrf.mxu0
    %v236 = vadd.f32 %v80, %v235
    %237 = vmatmul.f32.gmra.mxu0 %v126
    %v238 = vpop.f32.mrf.mxu0
    %v239 = vadd.f32 %v80, %v238
    %240 = vmatmul.f32.gmra.mxu0 %v129
    %v241 = vpop.f32.mrf.mxu0
    %v242 = vadd.f32 %v80, %v241
    %243 = vmatmul.f32.gmra.mxu0 %v132
    %v244 = vpop.f32.mrf.mxu0
    %v245 = vadd.f32 %v80, %v244
    %246 = vmatmul.f32.gmra.mxu0 %v135
    %v247 = vpop.f32.mrf.mxu0
    %v248 = vadd.f32 %v80, %v247
    %249 = vmatmul.f32.gmra.mxu0 %v138
    %v250 = vpop.f32.mrf.mxu0
    %v251 = vadd.f32 %v80, %v250
    %252 = vmatmul.f32.gmra.mxu0 %v141
    %v253 = vpop.f32.mrf.mxu0
    %v254 = vadd.f32 %v80, %v253
    %255 = vmatmul.f32.gmra.mxu0 %v144
    %v256 = vpop.f32.mrf.mxu0
    %v257 = vadd.f32 %v80, %v256
    %258 = vmatmul.f32.gmra.mxu0 %v147
    %v259 = vpop.f32.mrf.mxu0
    %v260 = vadd.f32 %v80, %v259
    %261 = vmatmul.f32.gmra.mxu0 %v150
    %v262 = vpop.f32.mrf.mxu0
    %v263 = vadd.f32 %v80, %v262
    %264 = vmatmul.f32.gmra.mxu0 %v153
    %v265 = vpop.f32.mrf.mxu0
    %v266 = vadd.f32 %v80, %v265
    %267 = vmatmul.f32.gmra.mxu0 %v156
    %v268 = vpop.f32.mrf.mxu0
    %v269 = vadd.f32 %v80, %v268
    %270 = vmatmul.f32.gmra.mxu0 %v159
    %v271 = vpop.f32.mrf.mxu0
    %v272 = vadd.f32 %v80, %v271
    %273 = vmatmul.f32.gmra.mxu0 %v162
    %v274 = vpop.f32.mrf.mxu0
    %v275 = vadd.f32 %v80, %v274
    %276 = vmatmul.f32.gmra.mxu0 %v165
    %v277 = vpop.f32.mrf.mxu0
    %v278 = vadd.f32 %v80, %v277
    %279 = vmatmul.f32.gmra.mxu0 %v168
    %v280 = vpop.f32.mrf.mxu0
    %v281 = vadd.f32 %v80, %v280
    %282 = vmatmul.f32.gmra.mxu0 %v171
    %v283 = vpop.f32.mrf.mxu0
    %v284 = vadd.f32 %v80, %v283
    %285 = vmatmul.f32.gmra.mxu0 %v174
    %v286 = vpop.f32.mrf.mxu0
    %v287 = vadd.f32 %v80, %v286
    %288 = vmatmul.f32.gmra.mxu0 %v177
    %v289 = vpop.f32.mrf.mxu0
    %v290 = vadd.f32 %v80, %v289
    %291 = vdwg.mxu0
    %v292 = vtanh.pop %v197
    %v293 = vtanh.pop %v200
    %v294 = vtanh.pop %v203
    %v295 = vtanh.pop %v206
    %v296 = vtanh.pop %v209
    %v297 = vtanh.pop %v212
    %v298 = vtanh.pop %v215
    %v299 = vtanh.pop %v218
    %v300 = vtanh.pop %v221
    %v301 = vtanh.pop %v224
    %v302 = vtanh.pop %v227
    %v303 = vtanh.pop %v230
    %v304 = vtanh.pop %v233
    %v305 = vtanh.pop %v236
    %v306 = vtanh.pop %v239
    %v307 = vtanh.pop %v242
    %v308 = vtanh.pop %v245
    %v309 = vtanh.pop %v248
    %v310 = vtanh.pop %v251
    %v311 = vtanh.pop %v254
    %v312 = vtanh.pop %v257
    %v313 = vtanh.pop %v260
    %v314 = vtanh.pop %v263
    %v315 = vtanh.pop %v266
    %v316 = vtanh.pop %v269
    %v317 = vtanh.pop %v272
    %v318 = vtanh.pop %v275
    %v319 = vtanh.pop %v278
    %v320 = vtanh.pop %v281
    %v321 = vtanh.pop %v284
    %v322 = vtanh.pop %v287
    %v323 = vtanh.pop %v290
    %v324 = vld [vmem:[%s3] sm:$0xff]
    %v325 = vld [vmem:[%s3 + $0x8] sm:$0xff]
    %v326 = vld [vmem:[%s3 + $0x10] sm:$0xff]
    %v327 = vld [vmem:[%s3 + $0x18] sm:$0xff]
    %v328 = vld [vmem:[%s4] sm:$0x1]
    %v330 = vperm.slane %v328, 0
    %vm332 = vcmask 261120
    %v334 = vsel %vm332, %v292, 0
    %v337 = vsel %vm332, %v293, 0
    %v340 = vsel %vm332, %v294, 0
    %v343 = vsel %vm332, %v295, 0
    %v346 = vsel %vm332, %v296, 0
    %v349 = vsel %vm332, %v297, 0
    %v352 = vsel %vm332, %v298, 0
    %v355 = vsel %vm332, %v299, 0
    %v358 = vsel %vm332, %v300, 0
    %v361 = vsel %vm332, %v301, 0
    %v364 = vsel %vm332, %v302, 0
    %v367 = vsel %vm332, %v303, 0
    %v370 = vsel %vm332, %v304, 0
    %v373 = vsel %vm332, %v305, 0
    %v376 = vsel %vm332, %v306, 0
    %v379 = vsel %vm332, %v307, 0
    %v382 = vsel %vm332, %v308, 0
    %v385 = vsel %vm332, %v309, 0
    %v388 = vsel %vm332, %v310, 0
    %v391 = vsel %vm332, %v311, 0
    %v394 = vsel %vm332, %v312, 0
    %v397 = vsel %vm332, %v313, 0
    %v400 = vsel %vm332, %v314, 0
    %v403 = vsel %vm332, %v315, 0
    %v406 = vsel %vm332, %v316, 0
    %v409 = vsel %vm332, %v317, 0
    %v412 = vsel %vm332, %v318, 0
    %v415 = vsel %vm332, %v319, 0
    %v418 = vsel %vm332, %v320, 0
    %v421 = vsel %vm332, %v321, 0
    %v424 = vsel %vm332, %v322, 0
    %v427 = vsel %vm332, %v323, 0
    %429 = vmatpush.msra.mxu0 0.0
    %430 = vmatpush.msra.mxu0 0.0
    %431 = vmatpush.msra.mxu0 0.0
    %432 = vmatpush.msra.mxu0 0.0
    %433 = vmatpush.msra.mxu0 0.0
    %434 = vmatpush.msra.mxu0 0.0
    %435 = vmatpush.msra.mxu0 0.0
    %436 = vmatpush.msra.mxu0 0.0
    %437 = vmatpush.msra.mxu0 0.0
    %438 = vmatpush.msra.mxu0 0.0
    %439 = vmatpush.msra.mxu0 0.0
    %440 = vmatpush.msra.mxu0 0.0
    %441 = vmatpush.msra.mxu0 %v327
    %442 = vmatpush.msra.mxu0 %v326
    %443 = vmatpush.msra.mxu0 %v325
    %444 = vmatpush.msra.mxu0 %v324
    %445 = vmatmul.f32.gmra.mxu0 %v334
    %v446 = vpop.f32.mrf.mxu0
    %v447 = vadd.f32 %v330, %v446
    %448 = vmatmul.f32.gmra.mxu0 %v337
    %v449 = vpop.f32.mrf.mxu0
    %v450 = vadd.f32 %v330, %v449
    %451 = vmatmul.f32.gmra.mxu0 %v340
    %v452 = vpop.f32.mrf.mxu0
    %v453 = vadd.f32 %v330, %v452
    %454 = vmatmul.f32.gmra.mxu0 %v343
    %v455 = vpop.f32.mrf.mxu0
    %v456 = vadd.f32 %v330, %v455
    %457 = vmatmul.f32.gmra.mxu0 %v346
    %v458 = vpop.f32.mrf.mxu0
    %v459 = vadd.f32 %v330, %v458
    %460 = vmatmul.f32.gmra.mxu0 %v349
    %v461 = vpop.f32.mrf.mxu0
    %v462 = vadd.f32 %v330, %v461
    %463 = vmatmul.f32.gmra.mxu0 %v352
    %v464 = vpop.f32.mrf.mxu0
    %v465 = vadd.f32 %v330, %v464
    %466 = vmatmul.f32.gmra.mxu0 %v355
    %v467 = vpop.f32.mrf.mxu0
    %v468 = vadd.f32 %v330, %v467
    %469 = vmatmul.f32.gmra.mxu0 %v358
    %v470 = vpop.f32.mrf.mxu0
    %v471 = vadd.f32 %v330, %v470
    %472 = vmatmul.f32.gmra.mxu0 %v361
    %v473 = vpop.f32.mrf.mxu0
    %v474 = vadd.f32 %v330, %v473
    %475 = vmatmul.f32.gmra.mxu0 %v364
    %v476 = vpop.f32.mrf.mxu0
    %v477 = vadd.f32 %v330, %v476
    %478 = vmatmul.f32.gmra.mxu0 %v367
    %v479 = vpop.f32.mrf.mxu0
    %v480 = vadd.f32 %v330, %v479
    %481 = vmatmul.f32.gmra.mxu0 %v370
    %v482 = vpop.f32.mrf.mxu0
    %v483 = vadd.f32 %v330, %v482
    %484 = vmatmul.f32.gmra.mxu0 %v373
    %v485 = vpop.f32.mrf.mxu0
    %v486 = vadd.f32 %v330, %v485
    %487 = vmatmul.f32.gmra.mxu0 %v376
    %v488 = vpop.f32.mrf.mxu0
    %v489 = vadd.f32 %v330, %v488
    %490 = vmatmul.f32.gmra.mxu0 %v379
    %v491 = vpop.f32.mrf.mxu0
    %v492 = vadd.f32 %v330, %v491
    %493 = vmatmul.f32.gmra.mxu0 %v382
    %v494 = vpop.f32.mrf.mxu0
    %v495 = vadd.f32 %v330, %v494
    %496 = vmatmul.f32.gmra.mxu0 %v385
    %v497 = vpop.f32.mrf.mxu0
    %v498 = vadd.f32 %v330, %v497
    %499 = vmatmul.f32.gmra.mxu0 %v388
    %v500 = vpop.f32.mrf.mxu0
    %v501 = vadd.f32 %v330, %v500
    %502 = vmatmul.f32.gmra.mxu0 %v391
    %v503 = vpop.f32.mrf.mxu0
    %v504 = vadd.f32 %v330, %v503
    %505 = vmatmul.f32.gmra.mxu0 %v394
    %v506 = vpop.f32.mrf.mxu0
    %v507 = vadd.f32 %v330, %v506
    %508 = vmatmul.f32.gmra.mxu0 %v397
    %v509 = vpop.f32.mrf.mxu0
    %v510 = vadd.f32 %v330, %v509
    %511 = vmatmul.f32.gmra.mxu0 %v400
    %v512 = vpop.f32.mrf.mxu0
    %v513 = vadd.f32 %v330, %v512
    %514 = vmatmul.f32.gmra.mxu0 %v403
    %v515 = vpop.f32.mrf.mxu0
    %v516 = vadd.f32 %v330, %v515
    %517 = vmatmul.f32.gmra.mxu0 %v406
    %v518 = vpop.f32.mrf.mxu0
    %v519 = vadd.f32 %v330, %v518
    %520 = vmatmul.f32.gmra.mxu0 %v409
    %v521 = vpop.f32.mrf.mxu0
    %v522 = vadd.f32 %v330, %v521
    %523 = vmatmul.f32.gmra.mxu0 %v412
    %v524 = vpop.f32.mrf.mxu0
    %v525 = vadd.f32 %v330, %v524
    %526 = vmatmul.f32.gmra.mxu0 %v415
    %v527 = vpop.f32.mrf.mxu0
    %v528 = vadd.f32 %v330, %v527
    %529 = vmatmul.f32.gmra.mxu0 %v418
    %v530 = vpop.f32.mrf.mxu0
    %v531 = vadd.f32 %v330, %v530
    %532 = vmatmul.f32.gmra.mxu0 %v421
    %v533 = vpop.f32.mrf.mxu0
    %v534 = vadd.f32 %v330, %v533
    %535 = vmatmul.f32.gmra.mxu0 %v424
    %v536 = vpop.f32.mrf.mxu0
    %v537 = vadd.f32 %v330, %v536
    %538 = vmatmul.f32.gmra.mxu0 %v427
    %v539 = vpop.f32.mrf.mxu0
    %v540 = vadd.f32 %v330, %v539
    %541 = vdwg.mxu0
    %v542 = vtanh.pop %v447
    %v543 = vtanh.pop %v450
    %v544 = vtanh.pop %v453
    %v545 = vtanh.pop %v456
    %v546 = vtanh.pop %v459
    %v547 = vtanh.pop %v462
    %v548 = vtanh.pop %v465
    %v549 = vtanh.pop %v468
    %v550 = vtanh.pop %v471
    %v551 = vtanh.pop %v474
    %v552 = vtanh.pop %v477
    %v553 = vtanh.pop %v480
    %v554 = vtanh.pop %v483
    %v555 = vtanh.pop %v486
    %v556 = vtanh.pop %v489
    %v557 = vtanh.pop %v492
    %v558 = vtanh.pop %v495
    %v559 = vtanh.pop %v498
    %v560 = vtanh.pop %v501
    %v561 = vtanh.pop %v504
    %v562 = vtanh.pop %v507
    %v563 = vtanh.pop %v510
    %v564 = vtanh.pop %v513
    %v565 = vtanh.pop %v516
    %v566 = vtanh.pop %v519
    %v567 = vtanh.pop %v522
    %v568 = vtanh.pop %v525
    %v569 = vtanh.pop %v528
    %v570 = vtanh.pop %v531
    %v571 = vtanh.pop %v534
    %v572 = vtanh.pop %v537
    %v573 = vtanh.pop %v540
    %v574 = vld [vmem:[%s5] sm:$0xff]
    %v575 = vld [vmem:[%s5 + $0x8] sm:$0xff]
    %v576 = vld [vmem:[%s5 + $0x10] sm:$0xff]
    %v577 = vld [vmem:[%s5 + $0x18] sm:$0xff]
    %v578 = vld [vmem:[%s6] sm:$0x1]
    %v580 = vperm.slane %v578, 0
    %v583 = vsel %vm332, %v542, 0
    %v586 = vsel %vm332, %v543, 0
    %v589 = vsel %vm332, %v544, 0
    %v592 = vsel %vm332, %v545, 0
    %v595 = vsel %vm332, %v546, 0
    %v598 = vsel %vm332, %v547, 0
    %v601 = vsel %vm332, %v548, 0
    %v604 = vsel %vm332, %v549, 0
    %v607 = vsel %vm332, %v550, 0
    %v610 = vsel %vm332, %v551, 0
    %v613 = vsel %vm332, %v552, 0
    %v616 = vsel %vm332, %v553, 0
    %v619 = vsel %vm332, %v554, 0
    %v622 = vsel %vm332, %v555, 0
    %v625 = vsel %vm332, %v556, 0
    %v628 = vsel %vm332, %v557, 0
    %v631 = vsel %vm332, %v558, 0
    %v634 = vsel %vm332, %v559, 0
    %v637 = vsel %vm332, %v560, 0
    %v640 = vsel %vm332, %v561, 0
    %v643 = vsel %vm332, %v562, 0
    %v646 = vsel %vm332, %v563, 0
    %v649 = vsel %vm332, %v564, 0
    %v652 = vsel %vm332, %v565, 0
    %v655 = vsel %vm332, %v566, 0
    %v658 = vsel %vm332, %v567, 0
    %v661 = vsel %vm332, %v568, 0
    %v664 = vsel %vm332, %v569, 0
    %v667 = vsel %vm332, %v570, 0
    %v670 = vsel %vm332, %v571, 0
    %v673 = vsel %vm332, %v572, 0
    %v676 = vsel %vm332, %v573, 0
    %678 = vmatpush.msra.mxu0 0.0
    %679 = vmatpush.msra.mxu0 0.0
    %680 = vmatpush.msra.mxu0 0.0
    %681 = vmatpush.msra.mxu0 0.0
    %682 = vmatpush.msra.mxu0 0.0
    %683 = vmatpush.msra.mxu0 0.0
    %684 = vmatpush.msra.mxu0 0.0
    %685 = vmatpush.msra.mxu0 0.0
    %686 = vmatpush.msra.mxu0 0.0
    %687 = vmatpush.msra.mxu0 0.0
    %688 = vmatpush.msra.mxu0 0.0
    %689 = vmatpush.msra.mxu0 0.0
    %690 = vmatpush.msra.mxu0 %v577
    %691 = vmatpush.msra.mxu0 %v576
    %692 = vmatpush.msra.mxu0 %v575
    %693 = vmatpush.msra.mxu0 %v574
    %694 = vmatmul.f32.gmra.mxu0 %v583
    %v695 = vpop.f32.mrf.mxu0
    %v696 = vadd.f32 %v580, %v695
    %697 = vmatmul.f32.gmra.mxu0 %v586
    %v698 = vpop.f32.mrf.mxu0
    %v699 = vadd.f32 %v580, %v698
    %700 = vmatmul.f32.gmra.mxu0 %v589
    %v701 = vpop.f32.mrf.mxu0
    %v702 = vadd.f32 %v580, %v701
    %703 = vmatmul.f32.gmra.mxu0 %v592
    %v704 = vpop.f32.mrf.mxu0
    %v705 = vadd.f32 %v580, %v704
    %706 = vmatmul.f32.gmra.mxu0 %v595
    %v707 = vpop.f32.mrf.mxu0
    %v708 = vadd.f32 %v580, %v707
    %709 = vmatmul.f32.gmra.mxu0 %v598
    %v710 = vpop.f32.mrf.mxu0
    %v711 = vadd.f32 %v580, %v710
    %712 = vmatmul.f32.gmra.mxu0 %v601
    %v713 = vpop.f32.mrf.mxu0
    %v714 = vadd.f32 %v580, %v713
    %715 = vmatmul.f32.gmra.mxu0 %v604
    %v716 = vpop.f32.mrf.mxu0
    %v717 = vadd.f32 %v580, %v716
    %718 = vmatmul.f32.gmra.mxu0 %v607
    %v719 = vpop.f32.mrf.mxu0
    %v720 = vadd.f32 %v580, %v719
    %721 = vmatmul.f32.gmra.mxu0 %v610
    %v722 = vpop.f32.mrf.mxu0
    %v723 = vadd.f32 %v580, %v722
    %724 = vmatmul.f32.gmra.mxu0 %v613
    %v725 = vpop.f32.mrf.mxu0
    %v726 = vadd.f32 %v580, %v725
    %727 = vmatmul.f32.gmra.mxu0 %v616
    %v728 = vpop.f32.mrf.mxu0
    %v729 = vadd.f32 %v580, %v728
    %730 = vmatmul.f32.gmra.mxu0 %v619
    %v731 = vpop.f32.mrf.mxu0
    %v732 = vadd.f32 %v580, %v731
    %733 = vmatmul.f32.gmra.mxu0 %v622
    %v734 = vpop.f32.mrf.mxu0
    %v735 = vadd.f32 %v580, %v734
    %736 = vmatmul.f32.gmra.mxu0 %v625
    %v737 = vpop.f32.mrf.mxu0
    %v738 = vadd.f32 %v580, %v737
    %739 = vmatmul.f32.gmra.mxu0 %v628
    %v740 = vpop.f32.mrf.mxu0
    %v741 = vadd.f32 %v580, %v740
    %742 = vmatmul.f32.gmra.mxu0 %v631
    %v743 = vpop.f32.mrf.mxu0
    %v744 = vadd.f32 %v580, %v743
    %745 = vmatmul.f32.gmra.mxu0 %v634
    %v746 = vpop.f32.mrf.mxu0
    %v747 = vadd.f32 %v580, %v746
    %748 = vmatmul.f32.gmra.mxu0 %v637
    %v749 = vpop.f32.mrf.mxu0
    %v750 = vadd.f32 %v580, %v749
    %751 = vmatmul.f32.gmra.mxu0 %v640
    %v752 = vpop.f32.mrf.mxu0
    %v753 = vadd.f32 %v580, %v752
    %754 = vmatmul.f32.gmra.mxu0 %v643
    %v755 = vpop.f32.mrf.mxu0
    %v756 = vadd.f32 %v580, %v755
    %757 = vmatmul.f32.gmra.mxu0 %v646
    %v758 = vpop.f32.mrf.mxu0
    %v759 = vadd.f32 %v580, %v758
    %760 = vmatmul.f32.gmra.mxu0 %v649
    %v761 = vpop.f32.mrf.mxu0
    %v762 = vadd.f32 %v580, %v761
    %763 = vmatmul.f32.gmra.mxu0 %v652
    %v764 = vpop.f32.mrf.mxu0
    %v765 = vadd.f32 %v580, %v764
    %766 = vmatmul.f32.gmra.mxu0 %v655
    %v767 = vpop.f32.mrf.mxu0
    %v768 = vadd.f32 %v580, %v767
    %769 = vmatmul.f32.gmra.mxu0 %v658
    %v770 = vpop.f32.mrf.mxu0
    %v771 = vadd.f32 %v580, %v770
    %772 = vmatmul.f32.gmra.mxu0 %v661
    %v773 = vpop.f32.mrf.mxu0
    %v774 = vadd.f32 %v580, %v773
    %775 = vmatmul.f32.gmra.mxu0 %v664
    %v776 = vpop.f32.mrf.mxu0
    %v777 = vadd.f32 %v580, %v776
    %778 = vmatmul.f32.gmra.mxu0 %v667
    %v779 = vpop.f32.mrf.mxu0
    %v780 = vadd.f32 %v580, %v779
    %781 = vmatmul.f32.gmra.mxu0 %v670
    %v782 = vpop.f32.mrf.mxu0
    %v783 = vadd.f32 %v580, %v782
    %784 = vmatmul.f32.gmra.mxu0 %v673
    %v785 = vpop.f32.mrf.mxu0
    %v786 = vadd.f32 %v580, %v785
    %787 = vmatmul.f32.gmra.mxu0 %v676
    %v788 = vpop.f32.mrf.mxu0
    %v789 = vadd.f32 %v580, %v788
    %790 = vdwg.mxu0
    %v791 = vtanh.pop %v696
    %v792 = vtanh.pop %v699
    %v793 = vtanh.pop %v702
    %v794 = vtanh.pop %v705
    %v795 = vtanh.pop %v708
    %v796 = vtanh.pop %v711
    %v797 = vtanh.pop %v714
    %v798 = vtanh.pop %v717
    %v799 = vtanh.pop %v720
    %v800 = vtanh.pop %v723
    %v801 = vtanh.pop %v726
    %v802 = vtanh.pop %v729
    %v803 = vtanh.pop %v732
    %v804 = vtanh.pop %v735
    %v805 = vtanh.pop %v738
    %v806 = vtanh.pop %v741
    %v807 = vtanh.pop %v744
    %v808 = vtanh.pop %v747
    %v809 = vtanh.pop %v750
    %v810 = vtanh.pop %v753
    %v811 = vtanh.pop %v756
    %v812 = vtanh.pop %v759
    %v813 = vtanh.pop %v762
    %v814 = vtanh.pop %v765
    %v815 = vtanh.pop %v768
    %v816 = vtanh.pop %v771
    %v817 = vtanh.pop %v774
    %v818 = vtanh.pop %v777
    %v819 = vtanh.pop %v780
    %v820 = vtanh.pop %v783
    %v821 = vtanh.pop %v786
    %v822 = vtanh.pop %v789
    %v823 = vld [vmem:[%s7] sm:$0xff]
    %v824 = vld [vmem:[%s7 + $0x8] sm:$0xff]
    %v825 = vld [vmem:[%s7 + $0x10] sm:$0xff]
    %v826 = vld [vmem:[%s7 + $0x18] sm:$0xff]
    %v827 = vld [vmem:[%s8] sm:$0x1]
    %v829 = vperm.slane %v827, 0
    %v832 = vsel %vm332, %v791, 0
    %v835 = vsel %vm332, %v792, 0
    %v838 = vsel %vm332, %v793, 0
    %v841 = vsel %vm332, %v794, 0
    %v844 = vsel %vm332, %v795, 0
    %v847 = vsel %vm332, %v796, 0
    %v850 = vsel %vm332, %v797, 0
    %v853 = vsel %vm332, %v798, 0
    %v856 = vsel %vm332, %v799, 0
    %v859 = vsel %vm332, %v800, 0
    %v862 = vsel %vm332, %v801, 0
    %v865 = vsel %vm332, %v802, 0
    %v868 = vsel %vm332, %v803, 0
    %v871 = vsel %vm332, %v804, 0
    %v874 = vsel %vm332, %v805, 0
    %v877 = vsel %vm332, %v806, 0
    %v880 = vsel %vm332, %v807, 0
    %v883 = vsel %vm332, %v808, 0
    %v886 = vsel %vm332, %v809, 0
    %v889 = vsel %vm332, %v810, 0
    %v892 = vsel %vm332, %v811, 0
    %v895 = vsel %vm332, %v812, 0
    %v898 = vsel %vm332, %v813, 0
    %v901 = vsel %vm332, %v814, 0
    %v904 = vsel %vm332, %v815, 0
    %v907 = vsel %vm332, %v816, 0
    %v910 = vsel %vm332, %v817, 0
    %v913 = vsel %vm332, %v818, 0
    %v916 = vsel %vm332, %v819, 0
    %v919 = vsel %vm332, %v820, 0
    %v922 = vsel %vm332, %v821, 0
    %v925 = vsel %vm332, %v822, 0
    %927 = vmatpush.msra.mxu0 0.0
    %928 = vmatpush.msra.mxu0 0.0
    %929 = vmatpush.msra.mxu0 0.0
    %930 = vmatpush.msra.mxu0 0.0
    %931 = vmatpush.msra.mxu0 0.0
    %932 = vmatpush.msra.mxu0 0.0
    %933 = vmatpush.msra.mxu0 0.0
    %934 = vmatpush.msra.mxu0 0.0
    %935 = vmatpush.msra.mxu0 0.0
    %936 = vmatpush.msra.mxu0 0.0
    %937 = vmatpush.msra.mxu0 0.0
    %938 = vmatpush.msra.mxu0 0.0
    %939 = vmatpush.msra.mxu0 %v826
    %940 = vmatpush.msra.mxu0 %v825
    %941 = vmatpush.msra.mxu0 %v824
    %942 = vmatpush.msra.mxu0 %v823
    %943 = vmatmul.f32.gmra.mxu0 %v832
    %v944 = vpop.f32.mrf.mxu0
    %v945 = vadd.f32 %v829, %v944
    %946 = vmatmul.f32.gmra.mxu0 %v835
    %v947 = vpop.f32.mrf.mxu0
    %v948 = vadd.f32 %v829, %v947
    %949 = vmatmul.f32.gmra.mxu0 %v838
    %v950 = vpop.f32.mrf.mxu0
    %v951 = vadd.f32 %v829, %v950
    %952 = vmatmul.f32.gmra.mxu0 %v841
    %v953 = vpop.f32.mrf.mxu0
    %v954 = vadd.f32 %v829, %v953
    %955 = vmatmul.f32.gmra.mxu0 %v844
    %v956 = vpop.f32.mrf.mxu0
    %v957 = vadd.f32 %v829, %v956
    %958 = vmatmul.f32.gmra.mxu0 %v847
    %v959 = vpop.f32.mrf.mxu0
    %v960 = vadd.f32 %v829, %v959
    %961 = vmatmul.f32.gmra.mxu0 %v850
    %v962 = vpop.f32.mrf.mxu0
    %v963 = vadd.f32 %v829, %v962
    %964 = vmatmul.f32.gmra.mxu0 %v853
    %v965 = vpop.f32.mrf.mxu0
    %v966 = vadd.f32 %v829, %v965
    %967 = vmatmul.f32.gmra.mxu0 %v856
    %v968 = vpop.f32.mrf.mxu0
    %v969 = vadd.f32 %v829, %v968
    %970 = vmatmul.f32.gmra.mxu0 %v859
    %v971 = vpop.f32.mrf.mxu0
    %v972 = vadd.f32 %v829, %v971
    %973 = vmatmul.f32.gmra.mxu0 %v862
    %v974 = vpop.f32.mrf.mxu0
    %v975 = vadd.f32 %v829, %v974
    %976 = vmatmul.f32.gmra.mxu0 %v865
    %v977 = vpop.f32.mrf.mxu0
    %v978 = vadd.f32 %v829, %v977
    %979 = vmatmul.f32.gmra.mxu0 %v868
    %v980 = vpop.f32.mrf.mxu0
    %v981 = vadd.f32 %v829, %v980
    %982 = vmatmul.f32.gmra.mxu0 %v871
    %v983 = vpop.f32.mrf.mxu0
    %v984 = vadd.f32 %v829, %v983
    %985 = vmatmul.f32.gmra.mxu0 %v874
    %v986 = vpop.f32.mrf.mxu0
    %v987 = vadd.f32 %v829, %v986
    %988 = vmatmul.f32.gmra.mxu0 %v877
    %v989 = vpop.f32.mrf.mxu0
    %v990 = vadd.f32 %v829, %v989
    %991 = vmatmul.f32.gmra.mxu0 %v880
    %v992 = vpop.f32.mrf.mxu0
    %v993 = vadd.f32 %v829, %v992
    %994 = vmatmul.f32.gmra.mxu0 %v883
    %v995 = vpop.f32.mrf.mxu0
    %v996 = vadd.f32 %v829, %v995
    %997 = vmatmul.f32.gmra.mxu0 %v886
    %v998 = vpop.f32.mrf.mxu0
    %v999 = vadd.f32 %v829, %v998
    %1000 = vmatmul.f32.gmra.mxu0 %v889
    %v1001 = vpop.f32.mrf.mxu0
    %v1002 = vadd.f32 %v829, %v1001
    %1003 = vmatmul.f32.gmra.mxu0 %v892
    %v1004 = vpop.f32.mrf.mxu0
    %v1005 = vadd.f32 %v829, %v1004
    %1006 = vmatmul.f32.gmra.mxu0 %v895
    %v1007 = vpop.f32.mrf.mxu0
    %v1008 = vadd.f32 %v829, %v1007
    %1009 = vmatmul.f32.gmra.mxu0 %v898
    %v1010 = vpop.f32.mrf.mxu0
    %v1011 = vadd.f32 %v829, %v1010
    %1012 = vmatmul.f32.gmra.mxu0 %v901
    %v1013 = vpop.f32.mrf.mxu0
    %v1014 = vadd.f32 %v829, %v1013
    %1015 = vmatmul.f32.gmra.mxu0 %v904
    %v1016 = vpop.f32.mrf.mxu0
    %v1017 = vadd.f32 %v829, %v1016
    %1018 = vmatmul.f32.gmra.mxu0 %v907
    %v1019 = vpop.f32.mrf.mxu0
    %v1020 = vadd.f32 %v829, %v1019
    %1021 = vmatmul.f32.gmra.mxu0 %v910
    %v1022 = vpop.f32.mrf.mxu0
    %v1023 = vadd.f32 %v829, %v1022
    %1024 = vmatmul.f32.gmra.mxu0 %v913
    %v1025 = vpop.f32.mrf.mxu0
    %v1026 = vadd.f32 %v829, %v1025
    %1027 = vmatmul.f32.gmra.mxu0 %v916
    %v1028 = vpop.f32.mrf.mxu0
    %v1029 = vadd.f32 %v829, %v1028
    %1030 = vmatmul.f32.gmra.mxu0 %v919
    %v1031 = vpop.f32.mrf.mxu0
    %v1032 = vadd.f32 %v829, %v1031
    %1033 = vmatmul.f32.gmra.mxu0 %v922
    %v1034 = vpop.f32.mrf.mxu0
    %v1035 = vadd.f32 %v829, %v1034
    %1036 = vmatmul.f32.gmra.mxu0 %v925
    %v1037 = vpop.f32.mrf.mxu0
    %v1038 = vadd.f32 %v829, %v1037
    %1039 = vdwg.mxu0
    %v1040 = vtanh.pop %v945
    %v1041 = vtanh.pop %v948
    %v1042 = vtanh.pop %v951
    %v1043 = vtanh.pop %v954
    %v1044 = vtanh.pop %v957
    %v1045 = vtanh.pop %v960
    %v1046 = vtanh.pop %v963
    %v1047 = vtanh.pop %v966
    %v1048 = vtanh.pop %v969
    %v1049 = vtanh.pop %v972
    %v1050 = vtanh.pop %v975
    %v1051 = vtanh.pop %v978
    %v1052 = vtanh.pop %v981
    %v1053 = vtanh.pop %v984
    %v1054 = vtanh.pop %v987
    %v1055 = vtanh.pop %v990
    %v1056 = vtanh.pop %v993
    %v1057 = vtanh.pop %v996
    %v1058 = vtanh.pop %v999
    %v1059 = vtanh.pop %v1002
    %v1060 = vtanh.pop %v1005
    %v1061 = vtanh.pop %v1008
    %v1062 = vtanh.pop %v1011
    %v1063 = vtanh.pop %v1014
    %v1064 = vtanh.pop %v1017
    %v1065 = vtanh.pop %v1020
    %v1066 = vtanh.pop %v1023
    %v1067 = vtanh.pop %v1026
    %v1068 = vtanh.pop %v1029
    %v1069 = vtanh.pop %v1032
    %v1070 = vtanh.pop %v1035
    %v1071 = vtanh.pop %v1038
    %v1072 = vld [vmem:[%s9] sm:$0xff]
    %v1073 = vld [vmem:[%s9 + $0x8] sm:$0xff]
    %v1074 = vld [vmem:[%s9 + $0x10] sm:$0xff]
    %v1075 = vld [vmem:[%s9 + $0x18] sm:$0xff]
    %v1076 = vld [vmem:[%s10] sm:$0x1]
    %v1078 = vperm.slane %v1076, 0
    %v1081 = vsel %vm332, %v1040, 0
    %v1084 = vsel %vm332, %v1041, 0
    %v1087 = vsel %vm332, %v1042, 0
    %v1090 = vsel %vm332, %v1043, 0
    %v1093 = vsel %vm332, %v1044, 0
    %v1096 = vsel %vm332, %v1045, 0
    %v1099 = vsel %vm332, %v1046, 0
    %v1102 = vsel %vm332, %v1047, 0
    %v1105 = vsel %vm332, %v1048, 0
    %v1108 = vsel %vm332, %v1049, 0
    %v1111 = vsel %vm332, %v1050, 0
    %v1114 = vsel %vm332, %v1051, 0
    %v1117 = vsel %vm332, %v1052, 0
    %v1120 = vsel %vm332, %v1053, 0
    %v1123 = vsel %vm332, %v1054, 0
    %v1126 = vsel %vm332, %v1055, 0
    %v1129 = vsel %vm332, %v1056, 0
    %v1132 = vsel %vm332, %v1057, 0
    %v1135 = vsel %vm332, %v1058, 0
    %v1138 = vsel %vm332, %v1059, 0
    %v1141 = vsel %vm332, %v1060, 0
    %v1144 = vsel %vm332, %v1061, 0
    %v1147 = vsel %vm332, %v1062, 0
    %v1150 = vsel %vm332, %v1063, 0
    %v1153 = vsel %vm332, %v1064, 0
    %v1156 = vsel %vm332, %v1065, 0
    %v1159 = vsel %vm332, %v1066, 0
    %v1162 = vsel %vm332, %v1067, 0
    %v1165 = vsel %vm332, %v1068, 0
    %v1168 = vsel %vm332, %v1069, 0
    %v1171 = vsel %vm332, %v1070, 0
    %v1174 = vsel %vm332, %v1071, 0
    %1176 = vmatpush.msra.mxu0 0.0
    %1177 = vmatpush.msra.mxu0 0.0
    %1178 = vmatpush.msra.mxu0 0.0
    %1179 = vmatpush.msra.mxu0 0.0
    %1180 = vmatpush.msra.mxu0 0.0
    %1181 = vmatpush.msra.mxu0 0.0
    %1182 = vmatpush.msra.mxu0 0.0
    %1183 = vmatpush.msra.mxu0 0.0
    %1184 = vmatpush.msra.mxu0 0.0
    %1185 = vmatpush.msra.mxu0 0.0
    %1186 = vmatpush.msra.mxu0 0.0
    %1187 = vmatpush.msra.mxu0 0.0
    %1188 = vmatpush.msra.mxu0 %v1075
    %1189 = vmatpush.msra.mxu0 %v1074
    %1190 = vmatpush.msra.mxu0 %v1073
    %1191 = vmatpush.msra.mxu0 %v1072
    %1192 = vmatmul.f32.gmra.mxu0 %v1081
    %v1193 = vpop.f32.mrf.mxu0
    %v1194 = vadd.f32 %v1078, %v1193
    %1195 = vmatmul.f32.gmra.mxu0 %v1084
    %v1196 = vpop.f32.mrf.mxu0
    %v1197 = vadd.f32 %v1078, %v1196
    %1198 = vmatmul.f32.gmra.mxu0 %v1087
    %v1199 = vpop.f32.mrf.mxu0
    %v1200 = vadd.f32 %v1078, %v1199
    %1201 = vmatmul.f32.gmra.mxu0 %v1090
    %v1202 = vpop.f32.mrf.mxu0
    %v1203 = vadd.f32 %v1078, %v1202
    %1204 = vmatmul.f32.gmra.mxu0 %v1093
    %v1205 = vpop.f32.mrf.mxu0
    %v1206 = vadd.f32 %v1078, %v1205
    %1207 = vmatmul.f32.gmra.mxu0 %v1096
    %v1208 = vpop.f32.mrf.mxu0
    %v1209 = vadd.f32 %v1078, %v1208
    %1210 = vmatmul.f32.gmra.mxu0 %v1099
    %v1211 = vpop.f32.mrf.mxu0
    %v1212 = vadd.f32 %v1078, %v1211
    %1213 = vmatmul.f32.gmra.mxu0 %v1102
    %v1214 = vpop.f32.mrf.mxu0
    %v1215 = vadd.f32 %v1078, %v1214
    %1216 = vmatmul.f32.gmra.mxu0 %v1105
    %v1217 = vpop.f32.mrf.mxu0
    %v1218 = vadd.f32 %v1078, %v1217
    %1219 = vmatmul.f32.gmra.mxu0 %v1108
    %v1220 = vpop.f32.mrf.mxu0
    %v1221 = vadd.f32 %v1078, %v1220
    %1222 = vmatmul.f32.gmra.mxu0 %v1111
    %v1223 = vpop.f32.mrf.mxu0
    %v1224 = vadd.f32 %v1078, %v1223
    %1225 = vmatmul.f32.gmra.mxu0 %v1114
    %v1226 = vpop.f32.mrf.mxu0
    %v1227 = vadd.f32 %v1078, %v1226
    %1228 = vmatmul.f32.gmra.mxu0 %v1117
    %v1229 = vpop.f32.mrf.mxu0
    %v1230 = vadd.f32 %v1078, %v1229
    %1231 = vmatmul.f32.gmra.mxu0 %v1120
    %v1232 = vpop.f32.mrf.mxu0
    %v1233 = vadd.f32 %v1078, %v1232
    %1234 = vmatmul.f32.gmra.mxu0 %v1123
    %v1235 = vpop.f32.mrf.mxu0
    %v1236 = vadd.f32 %v1078, %v1235
    %1237 = vmatmul.f32.gmra.mxu0 %v1126
    %v1238 = vpop.f32.mrf.mxu0
    %v1239 = vadd.f32 %v1078, %v1238
    %1240 = vmatmul.f32.gmra.mxu0 %v1129
    %v1241 = vpop.f32.mrf.mxu0
    %v1242 = vadd.f32 %v1078, %v1241
    %1243 = vmatmul.f32.gmra.mxu0 %v1132
    %v1244 = vpop.f32.mrf.mxu0
    %v1245 = vadd.f32 %v1078, %v1244
    %1246 = vmatmul.f32.gmra.mxu0 %v1135
    %v1247 = vpop.f32.mrf.mxu0
    %v1248 = vadd.f32 %v1078, %v1247
    %1249 = vmatmul.f32.gmra.mxu0 %v1138
    %v1250 = vpop.f32.mrf.mxu0
    %v1251 = vadd.f32 %v1078, %v1250
    %1252 = vmatmul.f32.gmra.mxu0 %v1141
    %v1253 = vpop.f32.mrf.mxu0
    %v1254 = vadd.f32 %v1078, %v1253
    %1255 = vmatmul.f32.gmra.mxu0 %v1144
    %v1256 = vpop.f32.mrf.mxu0
    %v1257 = vadd.f32 %v1078, %v1256
    %1258 = vmatmul.f32.gmra.mxu0 %v1147
    %v1259 = vpop.f32.mrf.mxu0
    %v1260 = vadd.f32 %v1078, %v1259
    %1261 = vmatmul.f32.gmra.mxu0 %v1150
    %v1262 = vpop.f32.mrf.mxu0
    %v1263 = vadd.f32 %v1078, %v1262
    %1264 = vmatmul.f32.gmra.mxu0 %v1153
    %v1265 = vpop.f32.mrf.mxu0
    %v1266 = vadd.f32 %v1078, %v1265
    %1267 = vmatmul.f32.gmra.mxu0 %v1156
    %v1268 = vpop.f32.mrf.mxu0
    %v1269 = vadd.f32 %v1078, %v1268
    %1270 = vmatmul.f32.gmra.mxu0 %v1159
    %v1271 = vpop.f32.mrf.mxu0
    %v1272 = vadd.f32 %v1078, %v1271
    %1273 = vmatmul.f32.gmra.mxu0 %v1162
    %v1274 = vpop.f32.mrf.mxu0
    %v1275 = vadd.f32 %v1078, %v1274
    %1276 = vmatmul.f32.gmra.mxu0 %v1165
    %v1277 = vpop.f32.mrf.mxu0
    %v1278 = vadd.f32 %v1078, %v1277
    %1279 = vmatmul.f32.gmra.mxu0 %v1168
    %v1280 = vpop.f32.mrf.mxu0
    %v1281 = vadd.f32 %v1078, %v1280
    %1282 = vmatmul.f32.gmra.mxu0 %v1171
    %v1283 = vpop.f32.mrf.mxu0
    %v1284 = vadd.f32 %v1078, %v1283
    %1285 = vmatmul.f32.gmra.mxu0 %v1174
    %v1286 = vpop.f32.mrf.mxu0
    %v1287 = vadd.f32 %v1078, %v1286
    %1288 = vdwg.mxu0
    %v1289 = vtanh.pop %v1194
    %v1290 = vtanh.pop %v1197
    %v1291 = vtanh.pop %v1200
    %v1292 = vtanh.pop %v1203
    %v1293 = vtanh.pop %v1206
    %v1294 = vtanh.pop %v1209
    %v1295 = vtanh.pop %v1212
    %v1296 = vtanh.pop %v1215
    %v1297 = vtanh.pop %v1218
    %v1298 = vtanh.pop %v1221
    %v1299 = vtanh.pop %v1224
    %v1300 = vtanh.pop %v1227
    %v1301 = vtanh.pop %v1230
    %v1302 = vtanh.pop %v1233
    %v1303 = vtanh.pop %v1236
    %v1304 = vtanh.pop %v1239
    %v1305 = vtanh.pop %v1242
    %v1306 = vtanh.pop %v1245
    %v1307 = vtanh.pop %v1248
    %v1308 = vtanh.pop %v1251
    %v1309 = vtanh.pop %v1254
    %v1310 = vtanh.pop %v1257
    %v1311 = vtanh.pop %v1260
    %v1312 = vtanh.pop %v1263
    %v1313 = vtanh.pop %v1266
    %v1314 = vtanh.pop %v1269
    %v1315 = vtanh.pop %v1272
    %v1316 = vtanh.pop %v1275
    %v1317 = vtanh.pop %v1278
    %v1318 = vtanh.pop %v1281
    %v1319 = vtanh.pop %v1284
    %v1320 = vtanh.pop %v1287
    %v1321 = vld [vmem:[%s11] sm:$0xff]
    %v1322 = vld [vmem:[%s11 + $0x8] sm:$0xff]
    %v1323 = vld [vmem:[%s11 + $0x10] sm:$0xff]
    %v1324 = vld [vmem:[%s11 + $0x18] sm:$0xff]
    %v1325 = vld [vmem:[%s12] sm:$0x1]
    %v1327 = vperm.slane %v1325, 0
    %v1330 = vsel %vm332, %v1289, 0
    %v1333 = vsel %vm332, %v1290, 0
    %v1336 = vsel %vm332, %v1291, 0
    %v1339 = vsel %vm332, %v1292, 0
    %v1342 = vsel %vm332, %v1293, 0
    %v1345 = vsel %vm332, %v1294, 0
    %v1348 = vsel %vm332, %v1295, 0
    %v1351 = vsel %vm332, %v1296, 0
    %v1354 = vsel %vm332, %v1297, 0
    %v1357 = vsel %vm332, %v1298, 0
    %v1360 = vsel %vm332, %v1299, 0
    %v1363 = vsel %vm332, %v1300, 0
    %v1366 = vsel %vm332, %v1301, 0
    %v1369 = vsel %vm332, %v1302, 0
    %v1372 = vsel %vm332, %v1303, 0
    %v1375 = vsel %vm332, %v1304, 0
    %v1378 = vsel %vm332, %v1305, 0
    %v1381 = vsel %vm332, %v1306, 0
    %v1384 = vsel %vm332, %v1307, 0
    %v1387 = vsel %vm332, %v1308, 0
    %v1390 = vsel %vm332, %v1309, 0
    %v1393 = vsel %vm332, %v1310, 0
    %v1396 = vsel %vm332, %v1311, 0
    %v1399 = vsel %vm332, %v1312, 0
    %v1402 = vsel %vm332, %v1313, 0
    %v1405 = vsel %vm332, %v1314, 0
    %v1408 = vsel %vm332, %v1315, 0
    %v1411 = vsel %vm332, %v1316, 0
    %v1414 = vsel %vm332, %v1317, 0
    %v1417 = vsel %vm332, %v1318, 0
    %v1420 = vsel %vm332, %v1319, 0
    %v1423 = vsel %vm332, %v1320, 0
    %1425 = vmatpush.msra.mxu0 0.0
    %1426 = vmatpush.msra.mxu0 0.0
    %1427 = vmatpush.msra.mxu0 0.0
    %1428 = vmatpush.msra.mxu0 0.0
    %1429 = vmatpush.msra.mxu0 0.0
    %1430 = vmatpush.msra.mxu0 0.0
    %1431 = vmatpush.msra.mxu0 0.0
    %1432 = vmatpush.msra.mxu0 0.0
    %1433 = vmatpush.msra.mxu0 0.0
    %1434 = vmatpush.msra.mxu0 0.0
    %1435 = vmatpush.msra.mxu0 0.0
    %1436 = vmatpush.msra.mxu0 0.0
    %1437 = vmatpush.msra.mxu0 %v1324
    %1438 = vmatpush.msra.mxu0 %v1323
    %1439 = vmatpush.msra.mxu0 %v1322
    %1440 = vmatpush.msra.mxu0 %v1321
    %1441 = vmatmul.f32.gmra.mxu0 %v1330
    %v1442 = vpop.f32.mrf.mxu0
    %v1443 = vadd.f32 %v1327, %v1442
    %1444 = vmatmul.f32.gmra.mxu0 %v1333
    %v1445 = vpop.f32.mrf.mxu0
    %v1446 = vadd.f32 %v1327, %v1445
    %1447 = vmatmul.f32.gmra.mxu0 %v1336
    %v1448 = vpop.f32.mrf.mxu0
    %v1449 = vadd.f32 %v1327, %v1448
    %1450 = vmatmul.f32.gmra.mxu0 %v1339
    %v1451 = vpop.f32.mrf.mxu0
    %v1452 = vadd.f32 %v1327, %v1451
    %1453 = vmatmul.f32.gmra.mxu0 %v1342
    %v1454 = vpop.f32.mrf.mxu0
    %v1455 = vadd.f32 %v1327, %v1454
    %1456 = vmatmul.f32.gmra.mxu0 %v1345
    %v1457 = vpop.f32.mrf.mxu0
    %v1458 = vadd.f32 %v1327, %v1457
    %1459 = vmatmul.f32.gmra.mxu0 %v1348
    %v1460 = vpop.f32.mrf.mxu0
    %v1461 = vadd.f32 %v1327, %v1460
    %1462 = vmatmul.f32.gmra.mxu0 %v1351
    %v1463 = vpop.f32.mrf.mxu0
    %v1464 = vadd.f32 %v1327, %v1463
    %1465 = vmatmul.f32.gmra.mxu0 %v1354
    %v1466 = vpop.f32.mrf.mxu0
    %v1467 = vadd.f32 %v1327, %v1466
    %1468 = vmatmul.f32.gmra.mxu0 %v1357
    %v1469 = vpop.f32.mrf.mxu0
    %v1470 = vadd.f32 %v1327, %v1469
    %1471 = vmatmul.f32.gmra.mxu0 %v1360
    %v1472 = vpop.f32.mrf.mxu0
    %v1473 = vadd.f32 %v1327, %v1472
    %1474 = vmatmul.f32.gmra.mxu0 %v1363
    %v1475 = vpop.f32.mrf.mxu0
    %v1476 = vadd.f32 %v1327, %v1475
    %1477 = vmatmul.f32.gmra.mxu0 %v1366
    %v1478 = vpop.f32.mrf.mxu0
    %v1479 = vadd.f32 %v1327, %v1478
    %1480 = vmatmul.f32.gmra.mxu0 %v1369
    %v1481 = vpop.f32.mrf.mxu0
    %v1482 = vadd.f32 %v1327, %v1481
    %1483 = vmatmul.f32.gmra.mxu0 %v1372
    %v1484 = vpop.f32.mrf.mxu0
    %v1485 = vadd.f32 %v1327, %v1484
    %1486 = vmatmul.f32.gmra.mxu0 %v1375
    %v1487 = vpop.f32.mrf.mxu0
    %v1488 = vadd.f32 %v1327, %v1487
    %1489 = vmatmul.f32.gmra.mxu0 %v1378
    %v1490 = vpop.f32.mrf.mxu0
    %v1491 = vadd.f32 %v1327, %v1490
    %1492 = vmatmul.f32.gmra.mxu0 %v1381
    %v1493 = vpop.f32.mrf.mxu0
    %v1494 = vadd.f32 %v1327, %v1493
    %1495 = vmatmul.f32.gmra.mxu0 %v1384
    %v1496 = vpop.f32.mrf.mxu0
    %v1497 = vadd.f32 %v1327, %v1496
    %1498 = vmatmul.f32.gmra.mxu0 %v1387
    %v1499 = vpop.f32.mrf.mxu0
    %v1500 = vadd.f32 %v1327, %v1499
    %1501 = vmatmul.f32.gmra.mxu0 %v1390
    %v1502 = vpop.f32.mrf.mxu0
    %v1503 = vadd.f32 %v1327, %v1502
    %1504 = vmatmul.f32.gmra.mxu0 %v1393
    %v1505 = vpop.f32.mrf.mxu0
    %v1506 = vadd.f32 %v1327, %v1505
    %1507 = vmatmul.f32.gmra.mxu0 %v1396
    %v1508 = vpop.f32.mrf.mxu0
    %v1509 = vadd.f32 %v1327, %v1508
    %1510 = vmatmul.f32.gmra.mxu0 %v1399
    %v1511 = vpop.f32.mrf.mxu0
    %v1512 = vadd.f32 %v1327, %v1511
    %1513 = vmatmul.f32.gmra.mxu0 %v1402
    %v1514 = vpop.f32.mrf.mxu0
    %v1515 = vadd.f32 %v1327, %v1514
    %1516 = vmatmul.f32.gmra.mxu0 %v1405
    %v1517 = vpop.f32.mrf.mxu0
    %v1518 = vadd.f32 %v1327, %v1517
    %1519 = vmatmul.f32.gmra.mxu0 %v1408
    %v1520 = vpop.f32.mrf.mxu0
    %v1521 = vadd.f32 %v1327, %v1520
    %1522 = vmatmul.f32.gmra.mxu0 %v1411
    %v1523 = vpop.f32.mrf.mxu0
    %v1524 = vadd.f32 %v1327, %v1523
    %1525 = vmatmul.f32.gmra.mxu0 %v1414
    %v1526 = vpop.f32.mrf.mxu0
    %v1527 = vadd.f32 %v1327, %v1526
    %1528 = vmatmul.f32.gmra.mxu0 %v1417
    %v1529 = vpop.f32.mrf.mxu0
    %v1530 = vadd.f32 %v1327, %v1529
    %1531 = vmatmul.f32.gmra.mxu0 %v1420
    %v1532 = vpop.f32.mrf.mxu0
    %v1533 = vadd.f32 %v1327, %v1532
    %1534 = vmatmul.f32.gmra.mxu0 %v1423
    %v1535 = vpop.f32.mrf.mxu0
    %v1536 = vadd.f32 %v1327, %v1535
    %1537 = vdwg.mxu0
    %1538 = vst [vmem:[#allocation2] sm:$0xff] %v1443
    %1539 = vst [vmem:[#allocation2 + $0x8] sm:$0xff] %v1446
    %1540 = vst [vmem:[#allocation2 + $0x10] sm:$0xff] %v1449
    %1541 = vst [vmem:[#allocation2 + $0x18] sm:$0xff] %v1452
    %1542 = vst [vmem:[#allocation2 + $0x20] sm:$0xff] %v1455
    %1543 = vst [vmem:[#allocation2 + $0x28] sm:$0xff] %v1458
    %1544 = vst [vmem:[#allocation2 + $0x30] sm:$0xff] %v1461
    %1545 = vst [vmem:[#allocation2 + $0x38] sm:$0xff] %v1464
    %1546 = vst [vmem:[#allocation2 + $0x40] sm:$0xff] %v1467
    %1547 = vst [vmem:[#allocation2 + $0x48] sm:$0xff] %v1470
    %1548 = vst [vmem:[#allocation2 + $0x50] sm:$0xff] %v1473
    %1549 = vst [vmem:[#allocation2 + $0x58] sm:$0xff] %v1476
    %1550 = vst [vmem:[#allocation2 + $0x60] sm:$0xff] %v1479
    %1551 = vst [vmem:[#allocation2 + $0x68] sm:$0xff] %v1482
    %1552 = vst [vmem:[#allocation2 + $0x70] sm:$0xff] %v1485
    %1553 = vst [vmem:[#allocation2 + $0x78] sm:$0xff] %v1488
    %1554 = vst [vmem:[#allocation2 + $0x80] sm:$0xff] %v1491
    %1555 = vst [vmem:[#allocation2 + $0x88] sm:$0xff] %v1494
    %1556 = vst [vmem:[#allocation2 + $0x90] sm:$0xff] %v1497
    %1557 = vst [vmem:[#allocation2 + $0x98] sm:$0xff] %v1500
    %1558 = vst [vmem:[#allocation2 + $0xa0] sm:$0xff] %v1503
    %1559 = vst [vmem:[#allocation2 + $0xa8] sm:$0xff] %v1506
    %1560 = vst [vmem:[#allocation2 + $0xb0] sm:$0xff] %v1509
    %1561 = vst [vmem:[#allocation2 + $0xb8] sm:$0xff] %v1512
    %1562 = vst [vmem:[#allocation2 + $0xc0] sm:$0xff] %v1515
    %1563 = vst [vmem:[#allocation2 + $0xc8] sm:$0xff] %v1518
    %1564 = vst [vmem:[#allocation2 + $0xd0] sm:$0xff] %v1521
    %1565 = vst [vmem:[#allocation2 + $0xd8] sm:$0xff] %v1524
    %1566 = vst [vmem:[#allocation2 + $0xe0] sm:$0xff] %v1527
    %1567 = vst [vmem:[#allocation2 + $0xe8] sm:$0xff] %v1530
    %1568 = vst [vmem:[#allocation2 + $0xf0] sm:$0xff] %v1533
    %1569 = vst [vmem:[#allocation2 + $0xf8] sm:$0xff] %v1536
    // Predicated region
    $region54: #{tpu_custom_call.1} parent=1 // pred_check
      _
    $region55: #{tpu_custom_call.1} parent=1 // pred_check_branch
      %1571 = sbr.rel (0) target = $region57
    $region56: #{tpu_custom_call.1} parent=1 // pred_region
      %1573 = vsyncadd [#allocation3], 0
      %s1574 = sshll.u32 [#allocation2], 4
      %s1575 = int_to_ptr.vmem [resolvable:$true] %s1574
      %s1576 = sshll.u32 %s13, 4
      %s1577 = int_to_ptr.hbm [resolvable:$true] %s1576
      %1582 = dma.vmem_to_hbm [thread:$0]  %s1575, 4096, %s1577, [#allocation3], 128, 128, 8
    $region57: #{tpu_custom_call.1} parent=1 // pred_fallthru
      _
    // Predicated region
    $region58: #{tpu_custom_call.1} parent=1 // pred_check
      _
    $region59: #{tpu_custom_call.1} parent=1 // pred_check_branch
      %1584 = sbr.rel (0) target = $region61
    $region60: #{tpu_custom_call.1} parent=1 // pred_region
      %1586 = dma.done [#allocation3], 4096
    $region61: #{tpu_custom_call.1} parent=1 // pred_fallthru
      _
    %1587 = vsyncpa [#allocation3], 1

</llo_original>
